<compile_context>
chip_gen: v6e
topology: v6e:2x2x1
jax: 0.10.0
libtpu: 0.0.40
codegen_flags: <defaults>
</compile_context>

<pallas_src>
import functools

import jax
import jax.numpy as jnp
from jax.experimental import pallas as pl
from jax.experimental.pallas import tpu as pltpu


def _round_up(x: int, mult: int) -> int:
    return ((x + mult - 1) // mult) * mult


@functools.lru_cache(maxsize=1)
def _vmem_capacity_bytes() -> int:
    try:
        return int(pltpu.get_tpu_info().vmem_capacity_bytes)
    except Exception:
        return 64 * 1024 * 1024  # conservative fallback (v7x per-core VMEM)


def _sublane_multiple(dtype) -> int:
    # Sub-32-bit dtypes pack along sublanes: bf16 vreg is [16,128], int8 [32,128].
    return {1: 32, 2: 16, 4: 8}.get(jnp.dtype(dtype).itemsize, 8)


# ------------------------------------------------------------------ kernels --

def _lp_kernel_full_k(x_ref, w_ref, b_ref, o_ref, *, apply_relu: bool):
    # x_ref: (tm, K)  w_ref: (K, tn)  b_ref: (1, tn)  o_ref: (tm, tn)
    y = jnp.dot(x_ref[...], w_ref[...], preferred_element_type=jnp.float32)  # MXU
    y = y + b_ref[...].astype(jnp.float32)
    if apply_relu:
        y = jnp.maximum(y, 0.0)
    o_ref[...] = y.astype(o_ref.dtype)


def _lp_kernel_k_tiled(x_ref, w_ref, b_ref, o_ref, acc_ref, *, apply_relu: bool):
    # Grid = (M_tiles, N_tiles, K_tiles); K (reduction) is the last axis.
    k = pl.program_id(2)

    @pl.when(k == 0)
    def _():
        acc_ref[...] = jnp.zeros_like(acc_ref)

    acc_ref[...] += jnp.dot(x_ref[...], w_ref[...],
                            preferred_element_type=jnp.float32)

    @pl.when(k == pl.num_programs(2) - 1)
    def _():
        y = acc_ref[...] + b_ref[...].astype(jnp.float32)
        if apply_relu:
            y = jnp.maximum(y, 0.0)
        o_ref[...] = y.astype(o_ref.dtype)


# ------------------------------------------------------------------ wrapper --

@functools.partial(
    jax.jit,
    static_argnames=("activate_fun", "tm", "tn", "tk", "vmem_budget_bytes"))
def linear_probe_forward(x, weight, bias, *, activate_fun: bool = False,
                         tm: int = 512, tn: int = 512, tk: int = 2048,
                         vmem_budget_bytes=None):
    """y = x @ weight.T + bias (+ ReLU if activate_fun); nn.Linear semantics.

    weight is PyTorch-layout [D_out, D_in]; any leading dims of x are flattened.
    """
    orig_shape = x.shape
    d_in = orig_shape[-1]
    d_out = weight.shape[0]

    x2d = x.reshape(-1, d_in)
    m = x2d.shape[0]

    in_bytes = jnp.dtype(x.dtype).itemsize
    out_bytes = in_bytes
    sub = _sublane_multiple(x.dtype)

    n_pad = _round_up(d_out, 128)

    # Weight/bias prep: one transpose + N lane-padding (glue; fuses under jit).
    w_t = weight.astype(x.dtype).T            # [d_in, d_out]
    b2d = bias.reshape(1, d_out)
    if n_pad != d_out:
        w_t = jnp.pad(w_t, ((0, 0), (0, n_pad - d_out)))
        b2d = jnp.pad(b2d, ((0, 0), (0, n_pad - d_out)))

    # ------------------------------------------- static tile / grid decisions
    cap = _vmem_capacity_bytes()
    vmem_limit = min(int(cap * 0.65), 80 * 1024 * 1024)  # ~41 MiB v7x, 80 MiB v5e/v6e
    budget = (int(vmem_limit * 0.85) if vmem_budget_bytes is None
              else int(vmem_budget_bytes))

    tm_eff = min(_round_up(tm, sub), _round_up(m, sub))
    tn_req = min(_round_up(tn, 128), n_pad)

    def full_k_ws(tm_, tn_):
        # double-buffered x / W^T / bias tiles + double-buffered output tile
        return (2 * (tm_ * d_in + d_in * tn_ + tn_) * in_bytes
                + 2 * tm_ * tn_ * out_bytes)

    def k_tiled_ws(tm_, tn_, tk_):
        return (2 * (tm_ * tk_ + tk_ * tn_ + tn_) * in_bytes
                + 2 * tm_ * tn_ * out_bytes
                + tm_ * tn_ * 4)              # f32 accumulator scratch

    k128 = _round_up(d_in, 128)
    use_k_tiling = (k128 > tk) or (full_k_ws(tm_eff, tn_req) > budget)

    if not use_k_tiling:
        k_pad, tk_eff, nk = d_in, d_in, 1
        # Collapse the N axis when the full output width fits -> W streamed once.
        tn_eff = n_pad if full_k_ws(tm_eff, n_pad) <= budget else tn_req
    else:
        tk_base = max(128, min(tk, k128))
        nk = pl.cdiv(k128, tk_base)
        tk_eff = _round_up(pl.cdiv(k128, nk), 128)   # balanced K tiles
        k_pad = tk_eff * nk
        tn_eff = n_pad if k_tiled_ws(tm_eff, n_pad, tk_eff) <= budget else tn_req

    n_tiles = pl.cdiv(n_pad, tn_eff)
    m_tiles = pl.cdiv(m, tm_eff)

    # v7x megacore: guarantee >=2 parallel steps when m is big enough to split
    # (one extra grid step is harmless on single-TC v5e/v6e).
    if m_tiles * n_tiles == 1 and m >= 512:
        tm_eff = max(sub, _round_up(pl.cdiv(m, 2), 128))
        m_tiles = pl.cdiv(m, tm_eff)

    apply_relu = bool(activate_fun)

    if use_k_tiling:
        # Zero-pad K so every K block is exact (padding is exact and usually
        # zero, since large D_in is typically already a tile multiple).
        x_in = jnp.pad(x2d, ((0, 0), (0, k_pad - d_in))) if k_pad != d_in else x2d
        w_in = jnp.pad(w_t, ((0, k_pad - d_in), (0, 0))) if k_pad != d_in else w_t
        kernel = functools.partial(_lp_kernel_k_tiled, apply_relu=apply_relu)
        grid = (m_tiles, n_tiles, nk)
        in_specs = [
            pl.BlockSpec((tm_eff, tk_eff), lambda i, j, k: (i, k)),   # x tile
            pl.BlockSpec((tk_eff, tn_eff), lambda i, j, k: (k, j)),   # W^T tile
            pl.BlockSpec((1, tn_eff), lambda i, j, k: (0, j)),        # bias tile
        ]
        out_spec = pl.BlockSpec((tm_eff, tn_eff), lambda i, j, k: (i, j))
        scratch = [pltpu.VMEM((tm_eff, tn_eff), jnp.float32)]
        semantics = ("parallel", "parallel", "arbitrary")
        x_streams, w_streams, k_used = n_tiles, m_tiles, k_pad
    else:
        x_in, w_in = x2d, w_t
        kernel = functools.partial(_lp_kernel_full_k, apply_relu=apply_relu)
        scratch = []
        k_used = d_in
        if n_tiles == 1:
            # 1-D grid over M: x and W^T each stream from HBM exactly once.
            grid = (m_tiles,)
            in_specs = [
                pl.BlockSpec((tm_eff, d_in), lambda i: (i, 0)),
                pl.BlockSpec((d_in, tn_eff), lambda i: (0, 0)),
                pl.BlockSpec((1, tn_eff), lambda i: (0, 0)),
            ]
            out_spec = pl.BlockSpec((tm_eff, tn_eff), lambda i: (i, 0))
            semantics = ("parallel",)
            x_streams, w_streams = 1, 1
        elif m >= n_pad:
            # x (the larger operand) stays resident per M tile; W^T re-streamed.
            grid = (m_tiles, n_tiles)
            in_specs = [
                pl.BlockSpec((tm_eff, d_in), lambda i, j: (i, 0)),
                pl.BlockSpec((d_in, tn_eff), lambda i, j: (0, j)),
                pl.BlockSpec((1, tn_eff), lambda i, j: (0, j)),
            ]
            out_spec = pl.BlockSpec((tm_eff, tn_eff), lambda i, j: (i, j))
            semantics = ("parallel", "parallel")
            x_streams, w_streams = 1, m_tiles
        else:
            # W^T (the larger operand) stays resident per N tile; x re-streamed.
            grid = (n_tiles, m_tiles)
            in_specs = [
                pl.BlockSpec((tm_eff, d_in), lambda j, i: (i, 0)),
                pl.BlockSpec((d_in, tn_eff), lambda j, i: (0, j)),
                pl.BlockSpec((1, tn_eff), lambda j, i: (0, j)),
            ]
            out_spec = pl.BlockSpec((tm_eff, tn_eff), lambda j, i: (i, j))
            semantics = ("parallel", "parallel")
            x_streams, w_streams = n_tiles, 1

    cost = pl.CostEstimate(
        flops=2 * m * d_in * d_out + m * d_out,
        transcendentals=0,
        bytes_accessed=int(x_streams * m * k_used * in_bytes
                           + w_streams * k_used * n_pad * in_bytes
                           + n_pad * in_bytes
                           + m * n_pad * out_bytes),
    )

    out2d = pl.pallas_call(
        kernel,
        out_shape=jax.ShapeDtypeStruct((m, n_pad), x.dtype),
        grid_spec=pltpu.PrefetchScalarGridSpec(
            num_scalar_prefetch=0,
            grid=grid,
            in_specs=in_specs,
            out_specs=out_spec,
            scratch_shapes=scratch,
        ),
        compiler_params=pltpu.CompilerParams(
            dimension_semantics=semantics,
            vmem_limit_bytes=vmem_limit,
        ),
        cost_estimate=cost,
    )(x_in, w_in, b2d)

    out2d = out2d[:, :d_out]                       # drop the N lane padding
    return out2d.reshape(*orig_shape[:-1], d_out)


# -------------------------------------------------------------------- demo --

if __name__ == "__main__":
    key = jax.random.PRNGKey(0)
    keys = jax.random.split(key, 8)

    def torch_linear_init(kw, kb, d_in, d_out, dtype=jnp.float32):
        # Mimics nn.Linear's U(-1/sqrt(in), 1/sqrt(in)) init.
        bound = 1.0 / jnp.sqrt(jnp.float32(d_in))
        w = jax.random.uniform(kw, (d_out, d_in), dtype, -bound, bound)
        b = jax.random.uniform(kb, (d_out,), dtype, -bound, bound)
        return w, b

    # 1/2) Probe-sized: (batch=2, seq=8, d_in=32) -> d_out=16, with/without ReLU.
    batch, seq, d_in, d_out = 2, 8, 32, 16
    x = jax.random.normal(keys[0], (batch, seq, d_in), jnp.float32)
    w, b = torch_linear_init(keys[1], keys[2], d_in, d_out)
    ref = x @ w.T + b
    y_lin = jax.block_until_ready(linear_probe_forward(x, w, b, activate_fun=False))
    y_rel = jax.block_until_ready(linear_probe_forward(x, w, b, activate_fun=True))
    assert y_lin.shape == (batch, seq, d_out)
    assert jnp.allclose(y_lin, ref, atol=1e-5, rtol=1e-5)
    assert jnp.allclose(y_rel, jnp.maximum(ref, 0.0), atol=1e-5, rtol=1e-5)

    # 3) Ragged M boundary block (no row padding of x in HBM).
    x3 = jax.random.normal(keys[3], (3, 8, d_in), jnp.float32)
    y3 = jax.block_until_ready(
        linear_probe_forward(x3, w, b, activate_fun=False, tm=16))
    assert jnp.allclose(y3, x3 @ w.T + b, atol=1e-5, rtol=1e-5)

    # 4) K-tiled accumulator path (forced via small tk), non-128 D_in / D_out.
    d_in4, d_out4 = 200, 48
    x4 = jax.random.normal(keys[4], (2, 8, d_in4), jnp.float32)
    w4, b4 = torch_linear_init(keys[5], keys[6], d_in4, d_out4)
    y4 = jax.block_until_ready(
        linear_probe_forward(x4, w4, b4, activate_fun=True, tk=128))
    assert jnp.allclose(y4, jnp.maximum(x4 @ w4.T + b4, 0.0), atol=1e-4, rtol=1e-4)

    # 5) N-tiled path with W^T resident (m < n_pad), forced via a tiny budget.
    m5, d_in5, d_out5 = 64, 128, 512
    x5 = jax.random.normal(keys[7], (m5, d_in5), jnp.float32)
    kw5, kb5 = jax.random.split(keys[0])
    w5, b5 = torch_linear_init(kw5, kb5, d_in5, d_out5)
    y5 = jax.block_until_ready(linear_probe_forward(
        x5, w5, b5, activate_fun=False, tn=128, vmem_budget_bytes=500_000))
    assert jnp.allclose(y5, x5 @ w5.T + b5, atol=1e-4, rtol=1e-4)

    # 6) N-tiled path with x resident (m >= n_pad), 2-D parallel grid.
    m6 = 1024
    x6 = jax.random.normal(jax.random.fold_in(key, 6), (m6, d_in5), jnp.float32)
    y6 = jax.block_until_ready(linear_probe_forward(
        x6, w5, b5, activate_fun=False, tm=256, tn=128,
        vmem_budget_bytes=700_000))
    assert jnp.allclose(y6, x6 @ w5.T + b5, atol=1e-4, rtol=1e-4)

    # 7) bf16 activations/weights (f32 MXU accumulation; looser tolerance).
    xb = x.astype(jnp.bfloat16)
    wb = w.astype(jnp.bfloat16)
    yb = jax.block_until_ready(
        linear_probe_forward(xb, wb, b, activate_fun=False))
    ref_b = xb.astype(jnp.float32) @ wb.T.astype(jnp.float32) + b
    assert yb.dtype == jnp.bfloat16
    assert jnp.allclose(yb.astype(jnp.float32), ref_b, atol=0.1, rtol=0.05)

    print("KERNEL_OK")
</pallas_src>

<mosaic_0001>
module attributes {stable_mosaic.version = 11 : i64} {
  func.func @_lp_kernel_full_k(%arg0: i32, %arg1: memref<16x32xf32, #tpu.memory_space<vmem>>, %arg2: memref<32x128xf32, #tpu.memory_space<vmem>>, %arg3: memref<1x128xf32, #tpu.memory_space<vmem>>, %arg4: memref<16x128xf32, #tpu.memory_space<vmem>>) attributes {dimension_semantics = [#tpu.dimension_semantics<parallel>], iteration_bounds = array<i64: 1>, scalar_prefetch = 0 : i64, scratch_operands = 0 : i64, tpu.core_type = #tpu.core_type<tc>, window_params = [{transform_indices = @transform_0, window_bounds = array<i64: 16, 32>}, {pipeline_mode = #tpu.pipeline_mode<synchronous>, transform_indices = @transform_1, window_bounds = array<i64: 32, 128>}, {pipeline_mode = #tpu.pipeline_mode<synchronous>, transform_indices = @transform_2, window_bounds = array<i64: 1, 128>}, {transform_indices = @transform_3, window_bounds = array<i64: 16, 128>}]} {
    %c0 = arith.constant 0 : index
    %c0_0 = arith.constant 0 : index
    %0 = vector.load %arg1[%c0, %c0_0] : memref<16x32xf32, #tpu.memory_space<vmem>>, vector<16x32xf32>
    %c0_1 = arith.constant 0 : index
    %c0_2 = arith.constant 0 : index
    %1 = vector.load %arg2[%c0_1, %c0_2] : memref<32x128xf32, #tpu.memory_space<vmem>>, vector<32x128xf32>
    %cst = arith.constant dense<0.000000e+00> : vector<16x128xf32>
    %2 = tpu.matmul %0, %1, %cst {dimension_numbers = #tpu.dot_dimension_numbers<[1], [0], [0], [1], [0, 0, 1, 1], [], []>} : vector<16x32xf32>, vector<32x128xf32>, vector<16x128xf32> -> vector<16x128xf32>
    %c0_3 = arith.constant 0 : index
    %c0_4 = arith.constant 0 : index
    %3 = vector.load %arg3[%c0_3, %c0_4] : memref<1x128xf32, #tpu.memory_space<vmem>>, vector<1x128xf32>
    %4 = vector.broadcast %3 : vector<1x128xf32> to vector<16x128xf32>
    %5 = arith.addf %2, %4 : vector<16x128xf32>
    %c0_5 = arith.constant 0 : index
    %c0_6 = arith.constant 0 : index
    %6 = vector.load %arg4[%c0_5, %c0_6] : memref<16x128xf32, #tpu.memory_space<vmem>>, vector<16x128xf32>
    tpu.vector_store %arg4[%c0_5, %c0_6], %5 {strides = array<i32>} : memref<16x128xf32, #tpu.memory_space<vmem>>, vector<16x128xf32>,
    return
  }
  func.func @transform_0(%arg0: i32) -> (i32, i32) {
    %c0_i32 = arith.constant 0 : i32
    %c0_i32_0 = arith.constant 0 : i32
    return %arg0, %c0_i32 : i32, i32
  }
  func.func @transform_1(%arg0: i32) -> (i32, i32) {
    %c0_i32 = arith.constant 0 : i32
    %c0_i32_0 = arith.constant 0 : i32
    %c0_i32_1 = arith.constant 0 : i32
    return %c0_i32, %c0_i32_0 : i32, i32
  }
  func.func @transform_2(%arg0: i32) -> (i32, i32) {
    %c0_i32 = arith.constant 0 : i32
    %c0_i32_0 = arith.constant 0 : i32
    %c0_i32_1 = arith.constant 0 : i32
    return %c0_i32, %c0_i32_0 : i32, i32
  }
  func.func @transform_3(%arg0: i32) -> (i32, i32) {
    %c0_i32 = arith.constant 0 : i32
    %c0_i32_0 = arith.constant 0 : i32
    return %arg0, %c0_i32 : i32, i32
  }
}

</mosaic_0001>

<llo_original>
// kernel: linear_probe_forward.1
$region0: #{linear_probe_forward.1}
  #allocation0 [shape = 'u32[]', space=smem, size = 0x4, offset = 0x4, fixed_abs, tag = 'smem constant byte address 0x4 - core index']
  #allocation1 [shape = 'u32[144,128]{1,0:T(1,128)}', space=vmem, size = 0x12000, scoped, tag = 'internal scratch']
  %s0 = inlined_call_operand.vmem [shape: f32[16,32], index: 0, kind: input, shape index: {}]
  %s1 = inlined_call_operand.vmem [shape: f32[32,128], index: 1, kind: input, shape index: {}]
  %s2 = inlined_call_operand.vmem [shape: f32[1,128], index: 2, kind: input, shape index: {}]
  %s3 = inlined_call_operand.vmem [shape: f32[16,128], index: 3, kind: output, shape index: {}]
  %s4 = sld [smem:[#allocation0]]
  $region22: #{linear_probe_forward.1} parent=0
    _
  %s6 = ssub.s32 1, %s4
  %s7 = scalar_select 0, %s6, %s4
  // Predicated region
  $region2: #{linear_probe_forward.1} parent=0 // pred_check
    _
  $region3: #{linear_probe_forward.1} parent=0 // pred_check_branch
    %9 = sbr.rel (0) target = $region5
  $region4: #{linear_probe_forward.1} parent=0 // pred_region
    _
  $region5: #{linear_probe_forward.1} parent=0 // pred_fallthru
    _
  // Predicated region
  $region6: #{linear_probe_forward.1} parent=0 // pred_check
    _
  $region7: #{linear_probe_forward.1} parent=0 // pred_check_branch
    %11 = sbr.rel (0) target = $region9
  $region8: #{linear_probe_forward.1} parent=0 // pred_region
    _
  $region9: #{linear_probe_forward.1} parent=0 // pred_fallthru
    _
  // Predicated region
  $region10: #{linear_probe_forward.1} parent=0 // pred_check
    _
  $region11: #{linear_probe_forward.1} parent=0 // pred_check_branch
    %13 = sbr.rel (0) target = $region13
  $region12: #{linear_probe_forward.1} parent=0 // pred_region
    _
  $region13: #{linear_probe_forward.1} parent=0 // pred_fallthru
    _
  %v14 = vld [vmem:[%s0] sm:$0xff]
  %v15 = vld [vmem:[%s0 + $0x8] sm:$0xff]
  %v16 = vld [vmem:[%s1] sm:$0xff]
  %v17 = vld [vmem:[%s1 + $0x8] sm:$0xff]
  %v18 = vld [vmem:[%s1 + $0x10] sm:$0xff]
  %v19 = vld [vmem:[%s1 + $0x18] sm:$0xff]
  %v20 = vld [vmem:[%s2] sm:$0x1]
  %v22 = vlaneseq
  %v23 = vshrl.u32 %v22, 7
  %v24 = vsub.s32 0, %v23
  %v25 = vrot.slane %v20, %v24
  %vm27 = vcmask 261120
  %v29 = vsel %vm27, %v14, 0
  %v32 = vsel %vm27, %v15, 0
  %34 = vmatprep.subr.mxu0 0.0
  %35 = vmatpush1.msra.mxu0 0.0
  %36 = vmatprep.subr.mxu0 0.0
  %37 = vmatpush1.msra.mxu0 0.0
  %38 = vmatprep.subr.mxu0 0.0
  %39 = vmatpush1.msra.mxu0 0.0
  %40 = vmatprep.subr.mxu0 0.0
  %41 = vmatpush1.msra.mxu0 0.0
  %42 = vmatprep.subr.mxu0 0.0
  %43 = vmatpush1.msra.mxu0 0.0
  %44 = vmatprep.subr.mxu0 0.0
  %45 = vmatpush1.msra.mxu0 0.0
  %46 = vmatprep.subr.mxu0 0.0
  %47 = vmatpush1.msra.mxu0 0.0
  %48 = vmatprep.subr.mxu0 0.0
  %49 = vmatpush1.msra.mxu0 0.0
  %50 = vmatprep.subr.mxu0 0.0
  %51 = vmatpush1.msra.mxu0 0.0
  %52 = vmatprep.subr.mxu0 0.0
  %53 = vmatpush1.msra.mxu0 0.0
  %54 = vmatprep.subr.mxu0 0.0
  %55 = vmatpush1.msra.mxu0 0.0
  %56 = vmatprep.subr.mxu0 0.0
  %57 = vmatpush1.msra.mxu0 0.0
  %58 = vmatprep.subr.mxu0 0.0
  %59 = vmatpush1.msra.mxu0 %v19
  %60 = vmatprep.subr.mxu0 0.0
  %61 = vmatpush1.msra.mxu0 %v18
  %62 = vmatprep.subr.mxu0 0.0
  %63 = vmatpush1.msra.mxu0 %v17
  %64 = vmatprep.subr.mxu0 0.0
  %65 = vmatpush1.msra.mxu0 %v16
  %66 = vmatprep.subr.mxu0 0.0
  %67 = vmatpush2.msra.mxu0 0.0
  %68 = vmatprep.subr.mxu0 0.0
  %69 = vmatpush2.msra.mxu0 0.0
  %70 = vmatprep.subr.mxu0 0.0
  %71 = vmatpush2.msra.mxu0 0.0
  %72 = vmatprep.subr.mxu0 0.0
  %73 = vmatpush2.msra.mxu0 0.0
  %74 = vmatprep.subr.mxu0 0.0
  %75 = vmatpush2.msra.mxu0 0.0
  %76 = vmatprep.subr.mxu0 0.0
  %77 = vmatpush2.msra.mxu0 0.0
  %78 = vmatprep.subr.mxu0 0.0
  %79 = vmatpush2.msra.mxu0 0.0
  %80 = vmatprep.subr.mxu0 0.0
  %81 = vmatpush2.msra.mxu0 0.0
  %82 = vmatprep.subr.mxu0 0.0
  %83 = vmatpush2.msra.mxu0 0.0
  %84 = vmatprep.subr.mxu0 0.0
  %85 = vmatpush2.msra.mxu0 0.0
  %86 = vmatprep.subr.mxu0 0.0
  %87 = vmatpush2.msra.mxu0 0.0
  %88 = vmatprep.subr.mxu0 0.0
  %89 = vmatpush2.msra.mxu0 0.0
  %90 = vmatprep.subr.mxu0 0.0
  %91 = vmatpush2.msra.mxu0 0.0
  %92 = vmatprep.subr.mxu0 0.0
  %93 = vmatpush2.msra.mxu0 0.0
  %94 = vmatprep.subr.mxu0 0.0
  %95 = vmatpush2.msra.mxu0 0.0
  %96 = vmatprep.subr.mxu0 0.0
  %97 = vmatpush2.msra.mxu0 0.0
  %98 = vmatprep.mubr.f32.mxu0 0.0
  %99 = vmatmul.mubr.f32.gmra.mxu0 %v29
  %v100 = vpop.f32.mrf.mxu0
  %v101 = vadd.f32 %v25, %v100
  %v102 = vpop.f32.mrf.mxu0
  %103 = vmatprep.mubr.f32.mxu0 0.0
  %104 = vmatmul.mubr.f32.gmra.mxu0 %v32
  %v105 = vpop.f32.mrf.mxu0
  %v106 = vadd.f32 %v25, %v105
  %v107 = vpop.f32.mrf.mxu0
  %108 = vdwg.mxu0
  %109 = vst [vmem:[%s3] sm:$0xff] %v101
  %110 = vst [vmem:[%s3 + $0x8] sm:$0xff] %v106
  // Predicated region
  $region14: #{linear_probe_forward.1} parent=0 // pred_check
    _
  $region15: #{linear_probe_forward.1} parent=0 // pred_check_branch
    %112 = sbr.rel (0) target = $region17
  $region16: #{linear_probe_forward.1} parent=0 // pred_region
    _
  $region17: #{linear_probe_forward.1} parent=0 // pred_fallthru
    _
  // Predicated region
  $region18: #{linear_probe_forward.1} parent=0 // pred_check
    _
  $region19: #{linear_probe_forward.1} parent=0 // pred_check_branch
    %114 = sbr.rel (0) target = $region21
  $region20: #{linear_probe_forward.1} parent=0 // pred_region
    _
  $region21: #{linear_probe_forward.1} parent=0 // pred_fallthru
    _

</llo_original>
